<compile_context>
chip_gen: v5e
topology: v5e:2x2
jax: 0.10.0
libtpu: 0.0.40
codegen_flags: <defaults>
</compile_context>

<pallas_src>
import math
import functools

import jax
import jax.numpy as jnp
import numpy as np
from jax import lax
from jax.experimental import pallas as pl
from jax.experimental.pallas import tpu as pltpu


def _pick_tile(n, preferred):
    """Largest tile from a fixed menu that divides n; falls back to the full dim.

    Guarantees either an (8,128)-friendly multiple-of-8 tile or the full dimension,
    so no padded rows ever need masking in the softmax / output store.
    """
    for t in (preferred, 512, 256, 128, 64, 32, 16, 8):
        if t <= n and n % t == 0:
            return t
    return n


def _vmem_limit_bytes(default=32 * 1024 * 1024):
    """Generation-aware VMEM budget: ~80% of physical per-core VMEM.

    ~102 MiB on v5e/v6e (128 MiB physical), ~51 MiB on v7x (64 MiB).  Falls back to a
    conservative 32 MiB if the hardware query is unavailable.
    """
    try:
        info = pltpu.get_tpu_info()
        cap = getattr(info, "vmem_capacity_bytes", None)
        if cap:
            return int(cap * 0.8)
    except Exception:
        pass
    return default


# ---------------------------------------------------------------------------
# One-time parameter fusion (hoisted out of the forward so no per-call concat/cast HLOs).
# ---------------------------------------------------------------------------
def fuse_attention_params(params, n_head, *, compute_dtype=jnp.bfloat16):
    """Build fused/pre-cast weights once.

    Weights are stored (C_in, C_out) (W_jax = W_torch.T), biases (1, C_out).
    The 1/sqrt(hd) attention scale is folded into W_q / b_q (numerically free).
    """
    C = params["wq"].shape[0]
    assert C % n_head == 0
    hd = C // n_head
    scale = 1.0 / math.sqrt(hd)
    w_qkv = jnp.concatenate(
        [params["wq"] * scale, params["wk"], params["wv"]], axis=1
    ).astype(compute_dtype)
    b_qkv = jnp.concatenate(
        [params["bq"] * scale, params["bk"], params["bv"]], axis=1
    ).astype(jnp.float32)
    return dict(
        w_qkv=w_qkv,
        b_qkv=b_qkv,
        w_p=params["wp"].astype(compute_dtype),
        b_p=params["bp"].astype(jnp.float32),
    )


# ---------------------------------------------------------------------------
# Pass 1: fused QKV projection, lane-dense (B, T, C) outputs.
# ---------------------------------------------------------------------------
def _qkv_proj_kernel(x_ref, w_ref, b_ref, q_ref, k_ref, v_ref):
    # x_ref: (tm, C); w_ref: (C, 3C) compute dtype; b_ref: (1, 3C) f32
    # q/k/v_ref: (tm, C) compute dtype, lane-dense stores (C is the full last dim).
    C = q_ref.shape[-1]
    x = x_ref[...].astype(w_ref.dtype)
    # Single wide MXU matmul (N = 3C) with f32 accumulation + bias.
    qkv = jnp.dot(x, w_ref[...], preferred_element_type=jnp.float32) + b_ref[...]
    # Static lane slices at multiples of C (lane-dense, no per-head masked stores).
    q_ref[...] = qkv[:, :C].astype(q_ref.dtype)
    k_ref[...] = qkv[:, C:2 * C].astype(k_ref.dtype)
    v_ref[...] = qkv[:, 2 * C:].astype(v_ref.dtype)


# ---------------------------------------------------------------------------
# Pass 2: flash-style causal attention + fused (single full-depth) output projection.
# ---------------------------------------------------------------------------
def _flash_attn_proj_kernel(q_ref, k_ref, v_ref, wp_ref, bp_ref, o_ref, y_ref, *,
                            n_head, tk, approx_recip):
    # q_ref : (tq, C) query tile (scale already folded into W_q), compute dtype
    # k_ref : (T,  C) full keys for this batch element (resident across q tiles)
    # v_ref : (T,  C)
    # wp_ref: (C, C) compute dtype; bp_ref: (1, C) f32
    # o_ref : (tq, C) output tile (lane-dense)
    # y_ref : (tq, C) VMEM scratch holding the concatenated per-head attention output
    tq, C = q_ref.shape
    hd = C // n_head
    qi = pl.program_id(1)
    q_start = qi * tq

    # Causal block skipping:
    #   tiles [0, n_full)      are entirely below the diagonal -> no mask needed
    #   tiles [n_full, n_kv)   straddle the diagonal            -> masked
    #   tiles [n_kv, ...)      are entirely above the diagonal  -> skipped
    n_full = q_start // tk
    n_kv = (q_start + tq + tk - 1) // tk

    q_pos = q_start + lax.broadcasted_iota(jnp.int32, (tq, tk), 0)

    for h in range(n_head):            # static loop: static lane slices, no big carry
        lo = h * hd
        q_h = q_ref[:, lo:lo + hd]                              # (tq, hd)

        def kv_step(start, carry, *, masked):
            m, l, acc = carry
            k_t = k_ref[pl.ds(start, tk), lo:lo + hd]           # (tk, hd)
            v_t = v_ref[pl.ds(start, tk), lo:lo + hd]           # (tk, hd)
            # Contract last axes directly (no explicit K transpose / relayout).
            s_qk = lax.dot_general(q_h, k_t, (((1,), (1,)), ((), ())),
                                   preferred_element_type=jnp.float32)  # (tq, tk) f32
            if masked:
                k_pos = start + lax.broadcasted_iota(jnp.int32, (tq, tk), 1)
                # Finite mask value: the first visited tile always contains key 0
                # (or is fully unmasked), so the running max stays finite and exp()
                # never hits (-inf) - (-inf).  Safe because s_qk is f32.
                s_qk = jnp.where(k_pos <= q_pos, s_qk, -1e30)
            m_new = jnp.maximum(m, jnp.max(s_qk, axis=-1, keepdims=True))
            alpha = jnp.exp(m - m_new)
            p = jnp.exp(s_qk - m_new)
            l_new = alpha * l + jnp.sum(p, axis=-1, keepdims=True)
            acc_new = alpha * acc + jnp.dot(p.astype(v_t.dtype), v_t,
                                            preferred_element_type=jnp.float32)
            return m_new, l_new, acc_new

        m0 = jnp.full((tq, 1), -jnp.inf, jnp.float32)
        l0 = jnp.zeros((tq, 1), jnp.float32)
        a0 = jnp.zeros((tq, hd), jnp.float32)
        # Full (unmasked) tiles: no iota / compare / select per step.
        carry = lax.fori_loop(
            0, n_full,
            lambda s, c: kv_step(pl.multiple_of(s * tk, tk), c, masked=False),
            (m0, l0, a0))
        # Diagonal remainder tiles: apply the causal mask.
        carry = lax.fori_loop(
            n_full, n_kv,
            lambda s, c: kv_step(pl.multiple_of(s * tk, tk), c, masked=True),
            carry)
        _, l, acc = carry

        # Normalize once per query row (EUP reciprocal on the bf16 path).
        # NOTE: approx=True is an intentional accuracy trade-off (bf16 path only).
        y_h = acc * pl.reciprocal(l, approx=approx_recip)       # (tq, hd) f32
        y_ref[:, lo:lo + hd] = y_h.astype(y_ref.dtype)

    # Single full-C-depth output projection (one MXU matmul) + bias.
    o_ref[...] = (jnp.dot(y_ref[...], wp_ref[...],
                          preferred_element_type=jnp.float32)
                  + bp_ref[...]).astype(o_ref.dtype)


# ---------------------------------------------------------------------------
# Wrapper
# ---------------------------------------------------------------------------
def causal_self_attention(x, fused, n_head):
    """Forward of minGPT CausalSelfAttention (eval mode).

    x: (B, T, C).  `fused` comes from fuse_attention_params (weights pre-cast to the
    MXU compute dtype, Q scale folded in).  Softmax math / accumulation stay f32.
    """
    B, T, C = x.shape
    assert C % n_head == 0
    compute_dtype = fused["w_qkv"].dtype
    approx_recip = jnp.dtype(compute_dtype) != jnp.dtype(jnp.float32)

    vmem_limit = _vmem_limit_bytes()

    # ---- Pass 1: fused QKV projection, lane-dense (B, T, C) outputs. ----
    tm = _pick_tile(T, 512)
    qkv_out_spec = pl.BlockSpec((None, tm, C), lambda b, i: (b, i, 0))
    q, k, v = pl.pallas_call(
        _qkv_proj_kernel,
        out_shape=(
            jax.ShapeDtypeStruct((B, T, C), compute_dtype),
            jax.ShapeDtypeStruct((B, T, C), compute_dtype),
            jax.ShapeDtypeStruct((B, T, C), compute_dtype),
        ),
        grid_spec=pltpu.PrefetchScalarGridSpec(
            num_scalar_prefetch=0,
            grid=(B, T // tm),
            in_specs=[
                pl.BlockSpec((None, tm, C), lambda b, i: (b, i, 0)),   # x tile
                # Grid-invariant weights/bias: single-buffered (fetched once).
                pl.BlockSpec((C, 3 * C), lambda b, i: (0, 0),
                             pipeline_mode=pl.Buffered(1)),
                pl.BlockSpec((1, 3 * C), lambda b, i: (0, 0),
                             pipeline_mode=pl.Buffered(1)),
            ],
            out_specs=[qkv_out_spec, qkv_out_spec, qkv_out_spec],
        ),
        compiler_params=pltpu.CompilerParams(
            dimension_semantics=("parallel", "parallel"),
            vmem_limit_bytes=vmem_limit,
        ),
    )(x, fused["w_qkv"], fused["b_qkv"])

    # ---- Pass 2: flash attention (causal, online softmax) + output projection. ----
    tq = _pick_tile(T, 128)
    # v6e/v7x MXUs are 256 wide; tk=256 fills QK^T's N dim and p@V's contraction depth.
    tk = _pick_tile(T, 256)
    # On v7x (2 TCs), shard the batch axis across cores when possible so both cores do
    # not each fetch and hold the full K/V; single-TC chips are unaffected.
    dims2 = ("parallel", "arbitrary") if B >= 2 else ("parallel", "parallel")

    out = pl.pallas_call(
        functools.partial(_flash_attn_proj_kernel, n_head=n_head, tk=tk,
                          approx_recip=approx_recip),
        out_shape=jax.ShapeDtypeStruct((B, T, C), x.dtype),
        grid_spec=pltpu.PrefetchScalarGridSpec(
            num_scalar_prefetch=0,
            grid=(B, T // tq),
            in_specs=[
                # query tile (lane-dense)
                pl.BlockSpec((None, tq, C), lambda b, i: (b, i, 0)),
                # full K / V per batch element; index constant across q tiles -> fetched
                # once per batch element, kept resident in VMEM, single-buffered.
                pl.BlockSpec((None, T, C), lambda b, i: (b, 0, 0),
                             pipeline_mode=pl.Buffered(1)),
                pl.BlockSpec((None, T, C), lambda b, i: (b, 0, 0),
                             pipeline_mode=pl.Buffered(1)),
                pl.BlockSpec((C, C), lambda b, i: (0, 0),
                             pipeline_mode=pl.Buffered(1)),             # W_p
                pl.BlockSpec((1, C), lambda b, i: (0, 0),
                             pipeline_mode=pl.Buffered(1)),             # b_p
            ],
            out_specs=pl.BlockSpec((None, tq, C), lambda b, i: (b, i, 0)),  # lane-dense
            scratch_shapes=[pltpu.VMEM((tq, C), compute_dtype)],
        ),
        compiler_params=pltpu.CompilerParams(
            dimension_semantics=dims2,
            vmem_limit_bytes=vmem_limit,
        ),
    )(q, k, v, fused["w_p"], fused["b_p"])
    return out


# ---------------------------------------------------------------------------
# Pure-JAX reference matching the PyTorch forward (eval mode).
# ---------------------------------------------------------------------------
def _reference(x, params, n_head):
    B, T, C = x.shape
    hd = C // n_head
    q = x @ params["wq"] + params["bq"]
    k = x @ params["wk"] + params["bk"]
    v = x @ params["wv"] + params["bv"]
    q = q.reshape(B, T, n_head, hd).transpose(0, 2, 1, 3)
    k = k.reshape(B, T, n_head, hd).transpose(0, 2, 1, 3)
    v = v.reshape(B, T, n_head, hd).transpose(0, 2, 1, 3)
    att = jnp.einsum("bhtd,bhsd->bhts", q, k) / math.sqrt(hd)
    mask = jnp.tril(jnp.ones((T, T), dtype=bool))
    att = jnp.where(mask[None, None], att, -jnp.inf)
    att = jax.nn.softmax(att, axis=-1)
    y = jnp.einsum("bhts,bhsd->bhtd", att, v)
    y = y.transpose(0, 2, 1, 3).reshape(B, T, C)
    return y @ params["wp"] + params["bp"]


if __name__ == "__main__":
    # Small config consistent with the module: n_embd=32, n_head=4, block_size >= T.
    B, T, C, n_head = 2, 8, 32, 4

    key = jax.random.PRNGKey(0)
    kx, kq, kk, kv, kp = jax.random.split(key, 5)

    x = jax.random.normal(kx, (B, T, C), dtype=jnp.float32)

    def init_linear(k):
        # deterministic init; (C_in, C_out) layout, bias (1, C_out)
        w = 0.02 * jax.random.normal(k, (C, C), dtype=jnp.float32)
        b = jnp.zeros((1, C), dtype=jnp.float32)
        return w, b

    wq, bq = init_linear(kq)
    wk, bk = init_linear(kk)
    wv, bv = init_linear(kv)
    wp, bp = init_linear(kp)
    # give biases nonzero deterministic values so they are exercised
    bq = bq + 0.01
    bk = bk - 0.01
    bv = bv + 0.02
    bp = bp - 0.02

    params = dict(wq=wq, bq=bq, wk=wk, bk=bk, wv=wv, bv=bv, wp=wp, bp=bp)

    ref = _reference(x, params, n_head)

    # 1) f32 MXU path: tight numerical check against the PyTorch-equivalent reference.
    fused_f32 = fuse_attention_params(params, n_head, compute_dtype=jnp.float32)
    out_f32 = jax.block_until_ready(causal_self_attention(x, fused_f32, n_head))
    np.testing.assert_allclose(np.asarray(out_f32), np.asarray(ref),
                               rtol=1e-5, atol=1e-5)

    # 2) bf16 MXU path (default perf configuration): softmax/accumulation stay f32,
    #    only bf16 input rounding differs from the f32 reference.
    fused_bf16 = fuse_attention_params(params, n_head, compute_dtype=jnp.bfloat16)
    out_bf16 = jax.block_until_ready(causal_self_attention(x, fused_bf16, n_head))
    np.testing.assert_allclose(np.asarray(out_bf16), np.asarray(ref),
                               rtol=2e-2, atol=2e-2)

    print("KERNEL_OK")
</pallas_src>

<mosaic_0001>
module attributes {stable_mosaic.version = 11 : i64} {
  func.func @_qkv_proj_kernel(%arg0: i32, %arg1: i32, %arg2: memref<1x8x32xf32, #tpu.memory_space<vmem>>, %arg3: memref<32x96xf32, #tpu.memory_space<vmem>>, %arg4: memref<1x96xf32, #tpu.memory_space<vmem>>, %arg5: memref<1x8x32xf32, #tpu.memory_space<vmem>>, %arg6: memref<1x8x32xf32, #tpu.memory_space<vmem>>, %arg7: memref<1x8x32xf32, #tpu.memory_space<vmem>>) attributes {dimension_semantics = [#tpu.dimension_semantics<parallel>, #tpu.dimension_semantics<parallel>], iteration_bounds = array<i64: 2, 1>, scalar_prefetch = 0 : i64, scratch_operands = 0 : i64, tpu.core_type = #tpu.core_type<tc>, window_params = [{transform_indices = @transform_0, window_bounds = array<i64: 1, 8, 32>}, {pipeline_mode = #tpu.pipeline_mode<synchronous>, transform_indices = @transform_1, window_bounds = array<i64: 32, 96>}, {pipeline_mode = #tpu.pipeline_mode<synchronous>, transform_indices = @transform_2, window_bounds = array<i64: 1, 96>}, {transform_indices = @transform_3, window_bounds = array<i64: 1, 8, 32>}, {transform_indices = @transform_4, window_bounds = array<i64: 1, 8, 32>}, {transform_indices = @transform_5, window_bounds = array<i64: 1, 8, 32>}]} {
    %c0 = arith.constant 0 : index
    %c0_0 = arith.constant 0 : index
    %c0_1 = arith.constant 0 : index
    %0 = vector.load %arg2[%c0, %c0_0, %c0_1] : memref<1x8x32xf32, #tpu.memory_space<vmem>>, vector<1x8x32xf32>
    %1 = vector.shape_cast %0 : vector<1x8x32xf32> to vector<8x32xf32>
    %c0_2 = arith.constant 0 : index
    %c0_3 = arith.constant 0 : index
    %2 = vector.load %arg3[%c0_2, %c0_3] : memref<32x96xf32, #tpu.memory_space<vmem>>, vector<32x96xf32>
    %cst = arith.constant dense<0.000000e+00> : vector<8x96xf32>
    %3 = tpu.matmul %1, %2, %cst {dimension_numbers = #tpu.dot_dimension_numbers<[1], [0], [0], [1], [0, 0, 1, 1], [], []>} : vector<8x32xf32>, vector<32x96xf32>, vector<8x96xf32> -> vector<8x96xf32>
    %c0_4 = arith.constant 0 : index
    %c0_5 = arith.constant 0 : index
    %4 = vector.load %arg4[%c0_4, %c0_5] : memref<1x96xf32, #tpu.memory_space<vmem>>, vector<1x96xf32>
    %5 = vector.broadcast %4 : vector<1x96xf32> to vector<8x96xf32>
    %6 = arith.addf %3, %5 : vector<8x96xf32>
    %7 = vector.extract_strided_slice %6 {offsets = [0, 0], sizes = [8, 32], strides = [1, 1]} : vector<8x96xf32> to vector<8x32xf32>
    %c0_6 = arith.constant 0 : index
    %c0_7 = arith.constant 0 : index
    %c0_8 = arith.constant 0 : index
    %8 = vector.load %arg5[%c0_6, %c0_7, %c0_8] : memref<1x8x32xf32, #tpu.memory_space<vmem>>, vector<1x8x32xf32>
    %9 = vector.shape_cast %8 : vector<1x8x32xf32> to vector<8x32xf32>
    %10 = vector.shape_cast %7 : vector<8x32xf32> to vector<1x8x32xf32>
    tpu.vector_store %arg5[%c0_6, %c0_7, %c0_8], %10 {strides = array<i32>} : memref<1x8x32xf32, #tpu.memory_space<vmem>>, vector<1x8x32xf32>,
    %11 = vector.extract_strided_slice %6 {offsets = [0, 32], sizes = [8, 32], strides = [1, 1]} : vector<8x96xf32> to vector<8x32xf32>
    %c0_9 = arith.constant 0 : index
    %c0_10 = arith.constant 0 : index
    %c0_11 = arith.constant 0 : index
    %12 = vector.load %arg6[%c0_9, %c0_10, %c0_11] : memref<1x8x32xf32, #tpu.memory_space<vmem>>, vector<1x8x32xf32>
    %13 = vector.shape_cast %12 : vector<1x8x32xf32> to vector<8x32xf32>
    %14 = vector.shape_cast %11 : vector<8x32xf32> to vector<1x8x32xf32>
    tpu.vector_store %arg6[%c0_9, %c0_10, %c0_11], %14 {strides = array<i32>} : memref<1x8x32xf32, #tpu.memory_space<vmem>>, vector<1x8x32xf32>,
    %15 = vector.extract_strided_slice %6 {offsets = [0, 64], sizes = [8, 32], strides = [1, 1]} : vector<8x96xf32> to vector<8x32xf32>
    %c0_12 = arith.constant 0 : index
    %c0_13 = arith.constant 0 : index
    %c0_14 = arith.constant 0 : index
    %16 = vector.load %arg7[%c0_12, %c0_13, %c0_14] : memref<1x8x32xf32, #tpu.memory_space<vmem>>, vector<1x8x32xf32>
    %17 = vector.shape_cast %16 : vector<1x8x32xf32> to vector<8x32xf32>
    %18 = vector.shape_cast %15 : vector<8x32xf32> to vector<1x8x32xf32>
    tpu.vector_store %arg7[%c0_12, %c0_13, %c0_14], %18 {strides = array<i32>} : memref<1x8x32xf32, #tpu.memory_space<vmem>>, vector<1x8x32xf32>,
    return
  }
  func.func @transform_0(%arg0: i32, %arg1: i32) -> (i32, i32, i32) {
    %c0_i32 = arith.constant 0 : i32
    %c0_i32_0 = arith.constant 0 : i32
    return %arg0, %arg1, %c0_i32 : i32, i32, i32
  }
  func.func @transform_1(%arg0: i32, %arg1: i32) -> (i32, i32) {
    %c0_i32 = arith.constant 0 : i32
    %c0_i32_0 = arith.constant 0 : i32
    %c0_i32_1 = arith.constant 0 : i32
    return %c0_i32, %c0_i32_0 : i32, i32
  }
  func.func @transform_2(%arg0: i32, %arg1: i32) -> (i32, i32) {
    %c0_i32 = arith.constant 0 : i32
    %c0_i32_0 = arith.constant 0 : i32
    %c0_i32_1 = arith.constant 0 : i32
    return %c0_i32, %c0_i32_0 : i32, i32
  }
  func.func @transform_3(%arg0: i32, %arg1: i32) -> (i32, i32, i32) {
    %c0_i32 = arith.constant 0 : i32
    %c0_i32_0 = arith.constant 0 : i32
    return %arg0, %arg1, %c0_i32 : i32, i32, i32
  }
  func.func @transform_4(%arg0: i32, %arg1: i32) -> (i32, i32, i32) {
    %c0_i32 = arith.constant 0 : i32
    %c0_i32_0 = arith.constant 0 : i32
    return %arg0, %arg1, %c0_i32 : i32, i32, i32
  }
  func.func @transform_5(%arg0: i32, %arg1: i32) -> (i32, i32, i32) {
    %c0_i32 = arith.constant 0 : i32
    %c0_i32_0 = arith.constant 0 : i32
    return %arg0, %arg1, %c0_i32 : i32, i32, i32
  }
}

</mosaic_0001>

<llo_original>
// kernel: tpu_custom_call.1
$region0: #{tpu_custom_call.1}
  #allocation0 [shape = 'u32[]', space=smem, size = 0x4, offset = 0x4, fixed_abs, tag = 'smem constant byte address 0x4 - core index']
  #allocation1 [shape = 'u32[72,128]{1,0:T(1,128)}', space=vmem, size = 0x9000, scoped, tag = 'internal scratch']
  %s0 = inlined_call_operand.hbm [shape: f32[2,8,32], index: 0, kind: input, shape index: {}]
  %s1 = inlined_call_operand.hbm [shape: f32[32,96], index: 1, kind: input, shape index: {}]
  %s2 = inlined_call_operand.vmem [shape: f32[1,96], index: 2, kind: input, shape index: {}]
  %s3 = inlined_call_operand.hbm [shape: f32[2,8,32], index: 3, kind: output, shape index: {0}]
  %s4 = inlined_call_operand.hbm [shape: f32[2,8,32], index: 4, kind: output, shape index: {1}]
  %s5 = inlined_call_operand.hbm [shape: f32[2,8,32], index: 5, kind: output, shape index: {2}]
  %6 = xla_tuple %s3, %s4, %s5
  %s7 = sld [smem:[#allocation0]]
  $region69: #{tpu_custom_call.1} parent=0
    _
  %s9 = ssub.s32 1, %s7
  %s10 = scalar_select 0, %s9, %s7
  $region1: #{tpu_custom_call.1} parent=0
    #allocation2 [shape = 'u8[8192]{0}', space=vmem, size = 0x2000, scoped, tag = 'input window, operand 0']
    #allocation3 [shape = 's32[2]{0}', space=sflag, size = 0x8, scoped, tag = 'scoped memory for tpu_custom_call.1']
    #allocation4 [shape = 's32[2]{0}', space=sflag, size = 0x8, scoped, tag = 'scoped memory for tpu_custom_call.1']
    #allocation5 [shape = 'u8[16384]{0}', space=vmem, size = 0x4000, scoped, tag = 'input window, operand 1, single buffered']
    #allocation6 [shape = 's32[1]{0}', space=sflag, size = 0x4, scoped, tag = 'scoped memory for tpu_custom_call.1']
    #allocation7 [shape = 'u8[8192]{0}', space=vmem, size = 0x2000, scoped, tag = 'output window, operand 0']
    #allocation8 [shape = 'u8[8192]{0}', space=vmem, size = 0x2000, scoped, tag = 'output window, operand 1']
    #allocation9 [shape = 's32[2]{0}', space=sflag, size = 0x8, scoped, tag = 'scoped memory for tpu_custom_call.1']
    #allocation10 [shape = 'u8[8192]{0}', space=vmem, size = 0x2000, scoped, tag = 'output window, operand 2']
    %11 = vsyncpa [#allocation3], 0
    %s12 = scalar_lea.sflag [#allocation3], 1
    %13 = vsyncpa %s12, 0
    %14 = vsyncpa [#allocation6], 0
    %15 = vsyncpa [#allocation4], 0
    %s16 = scalar_lea.sflag [#allocation4], 1
    %17 = vsyncpa %s16, 0
    %18 = vsyncpa [#allocation9], 0
    %s19 = scalar_lea.sflag [#allocation9], 1
    %20 = vsyncpa %s19, 0
    loop: start=0, step=1, limit=4
    $region2: #{tpu_custom_call.1} parent=1 // loop_pre_header
      _
    $region3: #{tpu_custom_call.1} parent=1 // loop_header
      %s22 = sphi 0, %s26
      %p23 = scmp.ge.s32.totalorder %s22, 4
      %s29 = sphi 0, %s41
      %s30 = sphi 0, %s37
      %s31 = sphi 0, %s29
      %s32 = sphi 0, %s30
      %s33 = sphi 0, %s31
      %s34 = sphi 0, %s32
      %s46 = sphi 0, %s48
      %s49 = sphi 0, %s46
      %s50 = sphi 0, %s49
      %s66 = sphi 0, %s50
      %s70 = sphi 0, %s70
      %s72 = sphi 0, %s70
      %s73 = sphi 0, %s72
      %s87 = sphi 0, %s73
      %s91 = sphi 0, %s91
      %s93 = sphi 0, %s91
      %s94 = sphi 0, %s93
      %s108 = sphi 0, %s94
      %s116 = sphi 0, %s118
      %s119 = sphi 0, %s116
      %s120 = sphi 0, %s119
      %s136 = sphi 0, %s120
      %s144 = sphi 0, %s146
      %s147 = sphi 0, %s144
      %s148 = sphi 0, %s147
      %s164 = sphi 0, %s148
      %s172 = sphi 0, %s174
      %s175 = sphi 0, %s172
      %s176 = sphi 0, %s175
      %s192 = sphi 0, %s176
    $region4: #{tpu_custom_call.1} parent=1 // loop_header_branch
      %25 = sbr.rel (%p23) target = $region8
    $region5: #{tpu_custom_call.1} parent=1 // loop_body
      %s27 = ssub.s32 %s22, 1
      %s28 = ssub.s32 %s22, 2
      %s35 = sadd.s32 1, %s30
      %p36 = scmp.ge.s32.totalorder %s35, 1
      %s37 = scalar_select %p36, 0, %s35
      %s38 = sadd.s32 1, %s29
      %s39 = scalar_select %p36, %s38, %s29
      %p40 = scmp.ge.s32.totalorder %s39, 2
      %s41 = scalar_select %p40, 0, %s39
      %s42 = ssub.s32 %s29, %s41
      %s43 = ssub.s32 %s30, %s37
      %s44 = sor.u32 %s42, %s43
      %p45 = scmp.eq.s32.totalorder %s44, 0
      %s47 = sadd.s32 %s46, 1
      %s48 = scalar_select %p45, %s46, %s47
      %p51 = pneg %p45
      %p52 = scmp.eq.s32.totalorder %s22, 1
      %p53 = por %p51, %p52
      %p54 = scmp.ne.s32.totalorder %s46, %s49
      %p55 = scmp.eq.s32.totalorder %s22, 0
      %p56 = por %p54, %p55
      %p57 = scmp.ne.s32.totalorder %s46, %s49
      %p58 = scmp.eq.s32.totalorder %s27, 1
      %p59 = por %p57, %p58
      %p60 = scmp.ne.s32.totalorder %s49, %s50
      %p61 = scmp.eq.s32.totalorder %s27, 0
      %p62 = por %p60, %p61
      %p63 = scmp.ne.s32.totalorder %s49, %s50
      %p64 = scmp.eq.s32.totalorder %s28, 1
      %p65 = por %p63, %p64
      %p67 = scmp.ne.s32.totalorder %s50, %s66
      %p68 = scmp.eq.s32.totalorder %s28, 0
      %p69 = por %p67, %p68
      %s71 = sadd.s32 %s70, 1
      %p74 = scmp.eq.s32.totalorder %s22, 1
      %p75 = scmp.ne.s32.totalorder %s70, %s72
      %p76 = scmp.eq.s32.totalorder %s22, 0
      %p77 = por %p75, %p76
      %p78 = scmp.ne.s32.totalorder %s70, %s72
      %p79 = scmp.eq.s32.totalorder %s27, 1
      %p80 = por %p78, %p79
      %p81 = scmp.ne.s32.totalorder %s72, %s73
      %p82 = scmp.eq.s32.totalorder %s27, 0
      %p83 = por %p81, %p82
      %p84 = scmp.ne.s32.totalorder %s72, %s73
      %p85 = scmp.eq.s32.totalorder %s28, 1
      %p86 = por %p84, %p85
      %p88 = scmp.ne.s32.totalorder %s73, %s87
      %p89 = scmp.eq.s32.totalorder %s28, 0
      %p90 = por %p88, %p89
      %s92 = sadd.s32 %s91, 1
      %p95 = scmp.eq.s32.totalorder %s22, 1
      %p96 = scmp.ne.s32.totalorder %s91, %s93
      %p97 = scmp.eq.s32.totalorder %s22, 0
      %p98 = por %p96, %p97
      %p99 = scmp.ne.s32.totalorder %s91, %s93
      %p100 = scmp.eq.s32.totalorder %s27, 1
      %p101 = por %p99, %p100
      %p102 = scmp.ne.s32.totalorder %s93, %s94
      %p103 = scmp.eq.s32.totalorder %s27, 0
      %p104 = por %p102, %p103
      %p105 = scmp.ne.s32.totalorder %s93, %s94
      %p106 = scmp.eq.s32.totalorder %s28, 1
      %p107 = por %p105, %p106
      %p109 = scmp.ne.s32.totalorder %s94, %s108
      %p110 = scmp.eq.s32.totalorder %s28, 0
      %p111 = por %p109, %p110
      %s112 = ssub.s32 %s29, %s41
      %s113 = ssub.s32 %s30, %s37
      %s114 = sor.u32 %s112, %s113
      %p115 = scmp.eq.s32.totalorder %s114, 0
      %s117 = sadd.s32 %s116, 1
      %s118 = scalar_select %p115, %s116, %s117
      %p121 = pneg %p115
      %p122 = scmp.eq.s32.totalorder %s22, 1
      %p123 = por %p121, %p122
      %p124 = scmp.ne.s32.totalorder %s116, %s119
      %p125 = scmp.eq.s32.totalorder %s22, 0
      %p126 = por %p124, %p125
      %p127 = scmp.ne.s32.totalorder %s116, %s119
      %p128 = scmp.eq.s32.totalorder %s27, 1
      %p129 = por %p127, %p128
      %p130 = scmp.ne.s32.totalorder %s119, %s120
      %p131 = scmp.eq.s32.totalorder %s27, 0
      %p132 = por %p130, %p131
      %p133 = scmp.ne.s32.totalorder %s119, %s120
      %p134 = scmp.eq.s32.totalorder %s28, 1
      %p135 = por %p133, %p134
      %p137 = scmp.ne.s32.totalorder %s120, %s136
      %p138 = scmp.eq.s32.totalorder %s28, 0
      %p139 = por %p137, %p138
      %s140 = ssub.s32 %s29, %s41
      %s141 = ssub.s32 %s30, %s37
      %s142 = sor.u32 %s140, %s141
      %p143 = scmp.eq.s32.totalorder %s142, 0
      %s145 = sadd.s32 %s144, 1
      %s146 = scalar_select %p143, %s144, %s145
      %p149 = pneg %p143
      %p150 = scmp.eq.s32.totalorder %s22, 1
      %p151 = por %p149, %p150
      %p152 = scmp.ne.s32.totalorder %s144, %s147
      %p153 = scmp.eq.s32.totalorder %s22, 0
      %p154 = por %p152, %p153
      %p155 = scmp.ne.s32.totalorder %s144, %s147
      %p156 = scmp.eq.s32.totalorder %s27, 1
      %p157 = por %p155, %p156
      %p158 = scmp.ne.s32.totalorder %s147, %s148
      %p159 = scmp.eq.s32.totalorder %s27, 0
      %p160 = por %p158, %p159
      %p161 = scmp.ne.s32.totalorder %s147, %s148
      %p162 = scmp.eq.s32.totalorder %s28, 1
      %p163 = por %p161, %p162
      %p165 = scmp.ne.s32.totalorder %s148, %s164
      %p166 = scmp.eq.s32.totalorder %s28, 0
      %p167 = por %p165, %p166
      %s168 = ssub.s32 %s29, %s41
      %s169 = ssub.s32 %s30, %s37
      %s170 = sor.u32 %s168, %s169
      %p171 = scmp.eq.s32.totalorder %s170, 0
      %s173 = sadd.s32 %s172, 1
      %s174 = scalar_select %p171, %s172, %s173
      %p177 = pneg %p171
      %p178 = scmp.eq.s32.totalorder %s22, 1
      %p179 = por %p177, %p178
      %p180 = scmp.ne.s32.totalorder %s172, %s175
      %p181 = scmp.eq.s32.totalorder %s22, 0
      %p182 = por %p180, %p181
      %p183 = scmp.ne.s32.totalorder %s172, %s175
      %p184 = scmp.eq.s32.totalorder %s27, 1
      %p185 = por %p183, %p184
      %p186 = scmp.ne.s32.totalorder %s175, %s176
      %p187 = scmp.eq.s32.totalorder %s27, 0
      %p188 = por %p186, %p187
      %p189 = scmp.ne.s32.totalorder %s175, %s176
      %p190 = scmp.eq.s32.totalorder %s28, 1
      %p191 = por %p189, %p190
      %p193 = scmp.ne.s32.totalorder %s176, %s192
      %p194 = scmp.eq.s32.totalorder %s28, 0
      %p195 = por %p193, %p194
      %p196 = scmp.le.s32.totalorder 1, %s22
      %p197 = scmp.lt.s32.totalorder %s22, 3
      %p198 = pnand %p196, %p197
      %p199 = pneg %p198
      // Predicated region
      $region9: #{tpu_custom_call.1} parent=5 // pred_check
        _
      $region10: #{tpu_custom_call.1} parent=5 // pred_check_branch
        %201 = sbr.rel (%p198) target = $region12
      $region11: #{tpu_custom_call.1} parent=5 // pred_region
        %s202 = ssub.s32 %s22, 1
        // Predicated region
        $region13: #{tpu_custom_call.1} parent=11 // pred_check
          %p203 = pneg %p83
        $region14: #{tpu_custom_call.1} parent=11 // pred_check_branch
          %205 = sbr.rel (%p203) target = $region16
        $region15: #{tpu_custom_call.1} parent=11 // pred_region
          %207 = vsyncadd [#allocation6], 0
          %s208 = sshll.u32 %s1, 4
          %s209 = int_to_ptr.hbm [resolvable:$true] %s208
          %s210 = sshll.u32 [#allocation5], 4
          %s211 = int_to_ptr.vmem [resolvable:$true] %s210
          %216 = dma.hbm_to_vmem [thread:$0]  %s209, 512, %s211, [#allocation6], 128, 128, 8
        $region16: #{tpu_custom_call.1} parent=11 // pred_fallthru
          _
        // Predicated region
        $region17: #{tpu_custom_call.1} parent=11 // pred_check
          %p217 = pneg %p104
        $region18: #{tpu_custom_call.1} parent=11 // pred_check_branch
          %219 = sbr.rel (%p217) target = $region20
        $region19: #{tpu_custom_call.1} parent=11 // pred_region
          _
        $region20: #{tpu_custom_call.1} parent=11 // pred_fallthru
          _
      $region12: #{tpu_custom_call.1} parent=5 // pred_fallthru
        _
      %p220 = scmp.lt.s32.totalorder %s22, 2
      // Predicated region
      $region21: #{tpu_custom_call.1} parent=5 // pred_check
        %p221 = pneg %p220
      $region22: #{tpu_custom_call.1} parent=5 // pred_check_branch
        %223 = sbr.rel (%p221) target = $region24
      $region23: #{tpu_custom_call.1} parent=5 // pred_region
        // Predicated region
        $region25: #{tpu_custom_call.1} parent=23 // pred_check
          %p224 = pneg %p56
        $region26: #{tpu_custom_call.1} parent=23 // pred_check_branch
          %226 = sbr.rel (%p224) target = $region28
        $region27: #{tpu_custom_call.1} parent=23 // pred_region
          %s227 = sand.u32 %s46, 1
          %s228 = scalar_lea.sflag [#allocation3], %s227
          %s229 = sand.u32 %s46, 1
          %s230 = smul.addr %s229, 8
          %s231 = scalar_lea.vmem [#allocation2], %s230
          %233 = vsyncadd %s228, 0
          %s234 = sadd.s32 %s30, %s29
          %s235 = smul.addr %s234, 8
          %s236 = scalar_lea.hbm %s0, %s235
          %s238 = sshll.u32 %s236, 4
          %s239 = int_to_ptr.hbm [resolvable:$true] %s238
          %s240 = sshll.u32 %s231, 4
          %s241 = int_to_ptr.vmem [resolvable:$true] %s240
          %243 = dma.hbm_to_vmem [thread:$0]  %s239, 128, %s241, %s228
        $region28: #{tpu_custom_call.1} parent=23 // pred_fallthru
          _
      $region24: #{tpu_custom_call.1} parent=5 // pred_fallthru
        _
      %p244 = scmp.le.s32.totalorder 1, %s22
      %p245 = scmp.lt.s32.totalorder %s22, 3
      %p246 = pnand %p244, %p245
      %p247 = pneg %p246
      // Predicated region
      $region29: #{tpu_custom_call.1} parent=5 // pred_check
        _
      $region30: #{tpu_custom_call.1} parent=5 // pred_check_branch
        %249 = sbr.rel (%p246) target = $region32
      $region31: #{tpu_custom_call.1} parent=5 // pred_region
        %s250 = ssub.s32 %s22, 1
        %s251 = sand.u32 %s49, 1
        %s252 = scalar_lea.sflag [#allocation3], %s251
        %s253 = sand.u32 %s49, 1
        %s254 = smul.addr %s253, 8
        %s255 = scalar_lea.vmem [#allocation2], %s254
        // Predicated region
        $region33: #{tpu_custom_call.1} parent=31 // pred_check
          %p256 = pneg %p62
        $region34: #{tpu_custom_call.1} parent=31 // pred_check_branch
          %258 = sbr.rel (%p256) target = $region36
        $region35: #{tpu_custom_call.1} parent=31 // pred_region
          %260 = dma.done %s252, 128
        $region36: #{tpu_custom_call.1} parent=31 // pred_fallthru
          _
        // Predicated region
        $region37: #{tpu_custom_call.1} parent=31 // pred_check
          %p261 = pneg %p83
        $region38: #{tpu_custom_call.1} parent=31 // pred_check_branch
          %263 = sbr.rel (%p261) target = $region40
        $region39: #{tpu_custom_call.1} parent=31 // pred_region
          %265 = dma.done [#allocation6], 512
        $region40: #{tpu_custom_call.1} parent=31 // pred_fallthru
          _
        %s266 = sand.u32 %s49, 1
        %s267 = scalar_lea.sflag [#allocation3], %s266
        %s268 = sand.u32 %s49, 1
        %s269 = smul.addr %s268, 8
        %s270 = scalar_lea.vmem [#allocation2], %s269
        %p271 = pneg %p62
        %p272 = pneg %p59
        %p273 = pneg %p83
        %p274 = pneg %p80
        %p275 = pneg %p104
        %p276 = pneg %p101
        %p277 = pneg %p132
        %p278 = pneg %p129
        %s279 = sand.u32 %s119, 1
        %s280 = scalar_lea.sflag [#allocation4], %s279
        %s281 = sand.u32 %s119, 1
        %s282 = smul.addr %s281, 8
        %s283 = scalar_lea.vmem [#allocation7], %s282
        %p284 = pneg %p160
        %p285 = pneg %p157
        %s286 = sand.u32 %s27, 1
        %s287 = scalar_lea.sflag [#allocation9], %s286
        %s288 = sand.u32 %s147, 1
        %s289 = smul.addr %s288, 8
        %s290 = scalar_lea.vmem [#allocation8], %s289
        %p291 = pneg %p188
        %p292 = pneg %p185
        %s293 = sand.u32 %s27, 1
        %s294 = scalar_lea.sflag [#allocation9], %s293
        %s295 = sand.u32 %s175, 1
        %s296 = smul.addr %s295, 8
        %s297 = scalar_lea.vmem [#allocation10], %s296
        %v298 = vld [vmem:[%s255] sm:$0xff]
        %v299 = vld [vmem:[#allocation5] sm:$0xff]
        %v300 = vld [vmem:[#allocation5 + $0x8] sm:$0xff]
        %v301 = vld [vmem:[#allocation5 + $0x10] sm:$0xff]
        %v302 = vld [vmem:[#allocation5 + $0x18] sm:$0xff]
        %v303 = vld [vmem:[%s2] sm:$0x1]
        %v305 = vperm.slane %v303, 0
        %vm307 = vcmask 261120
        %v309 = vsel %vm307, %v298, 0
        %311 = vmatpush.msra.mxu0 0.0
        %312 = vmatpush.msra.mxu0 0.0
        %313 = vmatpush.msra.mxu0 0.0
        %314 = vmatpush.msra.mxu0 0.0
        %315 = vmatpush.msra.mxu0 0.0
        %316 = vmatpush.msra.mxu0 0.0
        %317 = vmatpush.msra.mxu0 0.0
        %318 = vmatpush.msra.mxu0 0.0
        %319 = vmatpush.msra.mxu0 0.0
        %320 = vmatpush.msra.mxu0 0.0
        %321 = vmatpush.msra.mxu0 0.0
        %322 = vmatpush.msra.mxu0 0.0
        %323 = vmatpush.msra.mxu0 %v302
        %324 = vmatpush.msra.mxu0 %v301
        %325 = vmatpush.msra.mxu0 %v300
        %326 = vmatpush.msra.mxu0 %v299
        %327 = vmatmul.f32.gmra.mxu0 %v309
        %v328 = vpop.f32.mrf.mxu0
        %v329 = vadd.f32 %v305, %v328
        %330 = vdwg.mxu0
        %331 = vst.msk [vmem:[%s283] sm:$0xff] %vm307, %v329
        %333 = vrot.lane.b32.xlu0 %v329, 96
        %v334 = vpop.permute.xlu0 %333
        %336 = vst.msk [vmem:[%s290] sm:$0xff] %vm307, %v334
        %337 = vrot.lane.b32.xlu0 %v329, 64
        %v338 = vpop.permute.xlu0 %337
        %340 = vst.msk [vmem:[%s297] sm:$0xff] %vm307, %v338
        %s341 = sand.u32 %s119, 1
        %s342 = scalar_lea.sflag [#allocation4], %s341
        %s343 = sand.u32 %s119, 1
        %s344 = smul.addr %s343, 8
        %s345 = scalar_lea.vmem [#allocation7], %s344
        %s346 = sand.u32 %s27, 1
        %s347 = scalar_lea.sflag [#allocation9], %s346
        %s348 = sand.u32 %s147, 1
        %s349 = smul.addr %s348, 8
        %s350 = scalar_lea.vmem [#allocation8], %s349
        %s351 = sand.u32 %s27, 1
        %s352 = scalar_lea.sflag [#allocation9], %s351
        %s353 = sand.u32 %s175, 1
        %s354 = smul.addr %s353, 8
        %s355 = scalar_lea.vmem [#allocation10], %s354
        // Predicated region
        $region41: #{tpu_custom_call.1} parent=31 // pred_check
          %p356 = pneg %p129
        $region42: #{tpu_custom_call.1} parent=31 // pred_check_branch
          %358 = sbr.rel (%p356) target = $region44
        $region43: #{tpu_custom_call.1} parent=31 // pred_region
          %360 = vsyncadd %s342, 0
          %s361 = sadd.s32 %s32, %s31
          %s362 = smul.addr %s361, 8
          %s363 = scalar_lea.hbm %s3, %s362
          %s365 = sshll.u32 %s345, 4
          %s366 = int_to_ptr.vmem [resolvable:$true] %s365
          %s367 = sshll.u32 %s363, 4
          %s368 = int_to_ptr.hbm [resolvable:$true] %s367
          %370 = dma.vmem_to_hbm [thread:$0]  %s366, 128, %s368, %s342
        $region44: #{tpu_custom_call.1} parent=31 // pred_fallthru
          _
        // Predicated region
        $region45: #{tpu_custom_call.1} parent=31 // pred_check
          %p371 = pneg %p157
        $region46: #{tpu_custom_call.1} parent=31 // pred_check_branch
          %373 = sbr.rel (%p371) target = $region48
        $region47: #{tpu_custom_call.1} parent=31 // pred_region
          %375 = vsyncadd %s347, 0
          %s376 = sadd.s32 %s32, %s31
          %s377 = smul.addr %s376, 8
          %s378 = scalar_lea.hbm %s4, %s377
          %s380 = sshll.u32 %s350, 4
          %s381 = int_to_ptr.vmem [resolvable:$true] %s380
          %s382 = sshll.u32 %s378, 4
          %s383 = int_to_ptr.hbm [resolvable:$true] %s382
          %385 = dma.vmem_to_hbm [thread:$0]  %s381, 128, %s383, %s347
        $region48: #{tpu_custom_call.1} parent=31 // pred_fallthru
          _
        // Predicated region
        $region49: #{tpu_custom_call.1} parent=31 // pred_check
          %p386 = pneg %p185
        $region50: #{tpu_custom_call.1} parent=31 // pred_check_branch
          %388 = sbr.rel (%p386) target = $region52
        $region51: #{tpu_custom_call.1} parent=31 // pred_region
          %390 = vsyncadd %s352, 0
          %s391 = sadd.s32 %s32, %s31
          %s392 = smul.addr %s391, 8
          %s393 = scalar_lea.hbm %s5, %s392
          %s395 = sshll.u32 %s355, 4
          %s396 = int_to_ptr.vmem [resolvable:$true] %s395
          %s397 = sshll.u32 %s393, 4
          %s398 = int_to_ptr.hbm [resolvable:$true] %s397
          %400 = dma.vmem_to_hbm [thread:$0]  %s396, 128, %s398, %s352
        $region52: #{tpu_custom_call.1} parent=31 // pred_fallthru
          _
      $region32: #{tpu_custom_call.1} parent=5 // pred_fallthru
        _
      %p401 = scmp.le.s32.totalorder 2, %s22
      // Predicated region
      $region53: #{tpu_custom_call.1} parent=5 // pred_check
        %p402 = pneg %p401
      $region54: #{tpu_custom_call.1} parent=5 // pred_check_branch
        %404 = sbr.rel (%p402) target = $region56
      $region55: #{tpu_custom_call.1} parent=5 // pred_region
        %s405 = ssub.s32 %s22, 2
        // Predicated region
        $region57: #{tpu_custom_call.1} parent=55 // pred_check
          %p406 = pneg %p135
        $region58: #{tpu_custom_call.1} parent=55 // pred_check_branch
          %408 = sbr.rel (%p406) target = $region60
        $region59: #{tpu_custom_call.1} parent=55 // pred_region
          %s409 = sand.u32 %s120, 1
          %s410 = scalar_lea.sflag [#allocation4], %s409
          %s411 = sand.u32 %s120, 1
          %s412 = smul.addr %s411, 8
          %s413 = scalar_lea.vmem [#allocation7], %s412
          %415 = dma.done %s410, 128
        $region60: #{tpu_custom_call.1} parent=55 // pred_fallthru
          _
        // Predicated region
        $region61: #{tpu_custom_call.1} parent=55 // pred_check
          %p416 = pneg %p163
        $region62: #{tpu_custom_call.1} parent=55 // pred_check_branch
          %418 = sbr.rel (%p416) target = $region64
        $region63: #{tpu_custom_call.1} parent=55 // pred_region
          %s419 = sand.u32 %s28, 1
          %s420 = scalar_lea.sflag [#allocation9], %s419
          %s421 = sand.u32 %s148, 1
          %s422 = smul.addr %s421, 8
          %s423 = scalar_lea.vmem [#allocation8], %s422
          %425 = dma.done %s420, 128
        $region64: #{tpu_custom_call.1} parent=55 // pred_fallthru
          _
        // Predicated region
        $region65: #{tpu_custom_call.1} parent=55 // pred_check
          %p426 = pneg %p191
        $region66: #{tpu_custom_call.1} parent=55 // pred_check_branch
          %428 = sbr.rel (%p426) target = $region68
        $region67: #{tpu_custom_call.1} parent=55 // pred_region
          %s429 = sand.u32 %s28, 1
          %s430 = scalar_lea.sflag [#allocation9], %s429
          %s431 = sand.u32 %s176, 1
          %s432 = smul.addr %s431, 8
          %s433 = scalar_lea.vmem [#allocation10], %s432
          %435 = dma.done %s430, 128
        $region68: #{tpu_custom_call.1} parent=55 // pred_fallthru
          _
      $region56: #{tpu_custom_call.1} parent=5 // pred_fallthru
        _
    $region6: #{tpu_custom_call.1} parent=1 // loop_footer
      %s26 = sadd.s32 1, %s22
    $region7: #{tpu_custom_call.1} parent=1 // loop_footer_branch
      %21 = sbr.rel target = $region3
    $region8: #{tpu_custom_call.1} parent=1 // loop_exit
      _
    %436 = vsyncpa [#allocation3], 1
    %s437 = scalar_lea.sflag [#allocation3], 1
    %438 = vsyncpa %s437, 1
    %439 = vsyncpa [#allocation6], 1
    %440 = vsyncpa [#allocation4], 1
    %s441 = scalar_lea.sflag [#allocation4], 1
    %442 = vsyncpa %s441, 1
    %443 = vsyncpa [#allocation9], 1
    %s444 = scalar_lea.sflag [#allocation9], 1
    %445 = vsyncpa %s444, 1

</llo_original>
